<compile_context>
chip_gen: v6e
topology: v6e:2x2x1
jax: 0.10.0
libtpu: 0.0.40
codegen_flags: <defaults>
</compile_context>

<pallas_src>
import jax
import jax.numpy as jnp
import numpy as np
from jax.experimental import pallas as pl
from jax.experimental.pallas import tpu as pltpu

K = 3       # conv kernel size
PAD = 1     # 'same' padding


def _spatial_attention_kernel(x_ref, w_ref, prob_ref, logit_ref):
    """x_ref: (1, C, H, W) VMEM; w_ref: (2, 9) SMEM; outputs: (1, 1, H, W)."""
    c = x_ref.shape[1]
    h = x_ref.shape[2]
    w = x_ref.shape[3]

    x = x_ref[0].astype(jnp.float32)                         # (C, H, W)

    # Channel mean / max, unrolled over C -> pure VPU elementwise work.
    s = x[0]
    m = x[0]
    for ci in range(1, c):
        v = x[ci]
        s = s + v
        m = jnp.maximum(m, v)
    avg = s * (1.0 / c)                                       # (H, W)

    # Build the 1-pixel zero halo in-register (no HBM pad, no strided loads).
    zrow = jnp.zeros((PAD, w), jnp.float32)
    zcol = jnp.zeros((h + 2 * PAD, PAD), jnp.float32)

    def pad1(t):
        t = jnp.concatenate([zrow, t, zrow], axis=0)          # (H+2, W)
        return jnp.concatenate([zcol, t, zcol], axis=1)       # (H+2, W+2)

    avg_p = pad1(avg)
    max_p = pad1(m)

    # 3x3 conv over the 2-channel [avg, max] map -> 1 channel; taps unrolled,
    # each tap is a unit-stride slice weighted by an SMEM scalar.
    acc = jnp.zeros((h, w), jnp.float32)
    for kh in range(K):
        for kw in range(K):
            wa = w_ref[0, kh * K + kw]                        # avg-channel tap
            wm = w_ref[1, kh * K + kw]                        # max-channel tap
            acc = acc + wa * avg_p[kh:kh + h, kw:kw + w]
            acc = acc + wm * max_p[kh:kh + h, kw:kw + w]

    logit_ref[0, 0] = acc.astype(logit_ref.dtype)

    # Softmax2d normalizes over the channel axis.  The conv has one output
    # channel, so softmax(acc) == exp(acc - acc) / sum == 1 everywhere; keep
    # the explicit (stable) computation to preserve the module semantics.
    e = jnp.exp(acc - acc)
    prob_ref[0, 0] = (e / e).astype(prob_ref.dtype)


def spatial_attention(x_nchw, conv_weight, *, return_logits=False):
    """x_nchw: (N, C, H, W); conv_weight: (1, 2, 3, 3) in PyTorch OIHW layout."""
    n, c, h, w = x_nchw.shape
    assert conv_weight.shape == (1, 2, K, K), conv_weight.shape
    w_smem = conv_weight.reshape(2, K * K).astype(jnp.float32)  # rows: [avg, max]

    probs, logits = pl.pallas_call(
        _spatial_attention_kernel,
        out_shape=(
            jax.ShapeDtypeStruct((n, 1, h, w), x_nchw.dtype),    # softmax output
            jax.ShapeDtypeStruct((n, 1, h, w), jnp.float32),     # conv logits
        ),
        grid_spec=pltpu.PrefetchScalarGridSpec(
            num_scalar_prefetch=0,
            grid=(n,),
            in_specs=[
                pl.BlockSpec((1, c, h, w), lambda i: (i, 0, 0, 0)),
                pl.BlockSpec(memory_space=pltpu.MemorySpace.SMEM),
            ],
            out_specs=[
                pl.BlockSpec((1, 1, h, w), lambda i: (i, 0, 0, 0)),
                pl.BlockSpec((1, 1, h, w), lambda i: (i, 0, 0, 0)),
            ],
        ),
        compiler_params=pltpu.CompilerParams(
            dimension_semantics=("parallel",)),
    )(x_nchw, w_smem)
    # TODO(synk): for very large C*H*W, add an H-tiling grid axis with a 1-row
    # halo in the index_map so the per-step block stays well under VMEM.
    if return_logits:
        return probs, logits
    return probs


# ---------------------------------------------------------------------------
# Pure-JAX reference (XLA ops) for the correctness check.
# ---------------------------------------------------------------------------
def reference(x_nchw, conv_weight):
    avg = jnp.mean(x_nchw, axis=1, keepdims=True)
    mx = jnp.max(x_nchw, axis=1, keepdims=True)
    cat = jnp.concatenate([avg, mx], axis=1)                  # (N, 2, H, W)
    logits = jax.lax.conv_general_dilated(
        cat, conv_weight, (1, 1), [(PAD, PAD), (PAD, PAD)],
        dimension_numbers=("NCHW", "OIHW", "NCHW"),
        precision=jax.lax.Precision.HIGHEST)
    return jax.nn.softmax(logits, axis=1), logits


if __name__ == "__main__":
    key = jax.random.PRNGKey(0)
    kx, kw = jax.random.split(key)

    N, C, H, W = 2, 4, 16, 16
    x = jax.random.normal(kx, (N, C, H, W), jnp.float32)
    conv_w = 0.3 * jax.random.normal(kw, (1, 2, K, K), jnp.float32)  # OIHW

    probs, logits = spatial_attention(x, conv_w, return_logits=True)
    probs = jax.block_until_ready(probs)
    logits = jax.block_until_ready(logits)

    ref_probs, ref_logits = reference(x, conv_w)

    assert probs.shape == (N, 1, H, W), probs.shape
    np.testing.assert_allclose(np.asarray(logits), np.asarray(ref_logits),
                               rtol=1e-4, atol=1e-4)
    np.testing.assert_allclose(np.asarray(probs), np.asarray(ref_probs),
                               rtol=1e-5, atol=1e-5)
    print("KERNEL_OK")
</pallas_src>

<mosaic_0001>
module attributes {stable_mosaic.version = 11 : i64} {
  func.func @_spatial_attention_kernel(%arg0: i32, %arg1: memref<1x4x16x16xf32, #tpu.memory_space<vmem>>, %arg2: memref<2x9xf32, #tpu.memory_space<smem>>, %arg3: memref<1x1x16x16xf32, #tpu.memory_space<vmem>>, %arg4: memref<1x1x16x16xf32, #tpu.memory_space<vmem>>) attributes {dimension_semantics = [#tpu.dimension_semantics<parallel>], iteration_bounds = array<i64: 2>, scalar_prefetch = 0 : i64, scratch_operands = 0 : i64, tpu.core_type = #tpu.core_type<tc>, window_params = [{transform_indices = @transform_0, window_bounds = array<i64: 1, 4, 16, 16>}, {transform_indices = @transform_1, window_bounds = array<i64: 2, 9>}, {transform_indices = @transform_2, window_bounds = array<i64: 1, 1, 16, 16>}, {transform_indices = @transform_3, window_bounds = array<i64: 1, 1, 16, 16>}]} {
    %c0 = arith.constant 0 : index
    %c0_0 = arith.constant 0 : index
    %c0_1 = arith.constant 0 : index
    %c0_2 = arith.constant 0 : index
    %0 = vector.load %arg1[%c0, %c0_0, %c0_1, %c0_2] : memref<1x4x16x16xf32, #tpu.memory_space<vmem>>, vector<1x4x16x16xf32>
    %1 = vector.shape_cast %0 : vector<1x4x16x16xf32> to vector<4x16x16xf32>
    %2 = vector.extract_strided_slice %1 {offsets = [0, 0, 0], sizes = [1, 16, 16], strides = [1, 1, 1]} : vector<4x16x16xf32> to vector<1x16x16xf32>
    %3 = vector.shape_cast %2 : vector<1x16x16xf32> to vector<16x16xf32>
    %4 = vector.extract_strided_slice %1 {offsets = [0, 0, 0], sizes = [1, 16, 16], strides = [1, 1, 1]} : vector<4x16x16xf32> to vector<1x16x16xf32>
    %5 = vector.shape_cast %4 : vector<1x16x16xf32> to vector<16x16xf32>
    %6 = vector.extract_strided_slice %1 {offsets = [1, 0, 0], sizes = [1, 16, 16], strides = [1, 1, 1]} : vector<4x16x16xf32> to vector<1x16x16xf32>
    %7 = vector.shape_cast %6 : vector<1x16x16xf32> to vector<16x16xf32>
    %8 = arith.addf %3, %7 : vector<16x16xf32>
    %9 = arith.maximumf %5, %7 : vector<16x16xf32>
    %10 = vector.extract_strided_slice %1 {offsets = [2, 0, 0], sizes = [1, 16, 16], strides = [1, 1, 1]} : vector<4x16x16xf32> to vector<1x16x16xf32>
    %11 = vector.shape_cast %10 : vector<1x16x16xf32> to vector<16x16xf32>
    %12 = arith.addf %8, %11 : vector<16x16xf32>
    %13 = arith.maximumf %9, %11 : vector<16x16xf32>
    %14 = vector.extract_strided_slice %1 {offsets = [3, 0, 0], sizes = [1, 16, 16], strides = [1, 1, 1]} : vector<4x16x16xf32> to vector<1x16x16xf32>
    %15 = vector.shape_cast %14 : vector<1x16x16xf32> to vector<16x16xf32>
    %16 = arith.addf %12, %15 : vector<16x16xf32>
    %17 = arith.maximumf %13, %15 : vector<16x16xf32>
    %cst = arith.constant 2.500000e-01 : f32
    %18 = vector.broadcast %cst : f32 to vector<16x16xf32>
    %19 = arith.mulf %16, %18 : vector<16x16xf32>
    %cst_3 = arith.constant 0.000000e+00 : f32
    %20 = vector.broadcast %cst_3 : f32 to vector<1x16xf32>
    %cst_4 = arith.constant 0.000000e+00 : f32
    %21 = vector.broadcast %cst_4 : f32 to vector<18x1xf32>
    %22 = tpu.concatenate %20, %19, %20 in 0 : vector<1x16xf32>, vector<16x16xf32>, vector<1x16xf32> -> vector<18x16xf32>
    %23 = tpu.concatenate %21, %22, %21 in 1 : vector<18x1xf32>, vector<18x16xf32>, vector<18x1xf32> -> vector<18x18xf32>
    %24 = tpu.concatenate %20, %17, %20 in 0 : vector<1x16xf32>, vector<16x16xf32>, vector<1x16xf32> -> vector<18x16xf32>
    %25 = tpu.concatenate %21, %24, %21 in 1 : vector<18x1xf32>, vector<18x16xf32>, vector<18x1xf32> -> vector<18x18xf32>
    %cst_5 = arith.constant 0.000000e+00 : f32
    %26 = vector.broadcast %cst_5 : f32 to vector<16x16xf32>
    %c0_6 = arith.constant 0 : index
    %c0_7 = arith.constant 0 : index
    %27 = memref.load %arg2[%c0_6, %c0_7] : memref<2x9xf32, #tpu.memory_space<smem>>
    %c1 = arith.constant 1 : index
    %c0_8 = arith.constant 0 : index
    %28 = memref.load %arg2[%c1, %c0_8] : memref<2x9xf32, #tpu.memory_space<smem>>
    %29 = vector.extract_strided_slice %23 {offsets = [0, 0], sizes = [16, 16], strides = [1, 1]} : vector<18x18xf32> to vector<16x16xf32>
    %30 = vector.broadcast %27 : f32 to vector<16x16xf32>
    %31 = arith.mulf %30, %29 : vector<16x16xf32>
    %32 = arith.addf %26, %31 : vector<16x16xf32>
    %33 = vector.extract_strided_slice %25 {offsets = [0, 0], sizes = [16, 16], strides = [1, 1]} : vector<18x18xf32> to vector<16x16xf32>
    %34 = vector.broadcast %28 : f32 to vector<16x16xf32>
    %35 = arith.mulf %34, %33 : vector<16x16xf32>
    %36 = arith.addf %32, %35 : vector<16x16xf32>
    %c0_9 = arith.constant 0 : index
    %c1_10 = arith.constant 1 : index
    %37 = memref.load %arg2[%c0_9, %c1_10] : memref<2x9xf32, #tpu.memory_space<smem>>
    %c1_11 = arith.constant 1 : index
    %c1_12 = arith.constant 1 : index
    %38 = memref.load %arg2[%c1_11, %c1_12] : memref<2x9xf32, #tpu.memory_space<smem>>
    %39 = vector.extract_strided_slice %23 {offsets = [0, 1], sizes = [16, 16], strides = [1, 1]} : vector<18x18xf32> to vector<16x16xf32>
    %40 = vector.broadcast %37 : f32 to vector<16x16xf32>
    %41 = arith.mulf %40, %39 : vector<16x16xf32>
    %42 = arith.addf %36, %41 : vector<16x16xf32>
    %43 = vector.extract_strided_slice %25 {offsets = [0, 1], sizes = [16, 16], strides = [1, 1]} : vector<18x18xf32> to vector<16x16xf32>
    %44 = vector.broadcast %38 : f32 to vector<16x16xf32>
    %45 = arith.mulf %44, %43 : vector<16x16xf32>
    %46 = arith.addf %42, %45 : vector<16x16xf32>
    %c0_13 = arith.constant 0 : index
    %c2 = arith.constant 2 : index
    %47 = memref.load %arg2[%c0_13, %c2] : memref<2x9xf32, #tpu.memory_space<smem>>
    %c1_14 = arith.constant 1 : index
    %c2_15 = arith.constant 2 : index
    %48 = memref.load %arg2[%c1_14, %c2_15] : memref<2x9xf32, #tpu.memory_space<smem>>
    %49 = vector.extract_strided_slice %23 {offsets = [0, 2], sizes = [16, 16], strides = [1, 1]} : vector<18x18xf32> to vector<16x16xf32>
    %50 = vector.broadcast %47 : f32 to vector<16x16xf32>
    %51 = arith.mulf %50, %49 : vector<16x16xf32>
    %52 = arith.addf %46, %51 : vector<16x16xf32>
    %53 = vector.extract_strided_slice %25 {offsets = [0, 2], sizes = [16, 16], strides = [1, 1]} : vector<18x18xf32> to vector<16x16xf32>
    %54 = vector.broadcast %48 : f32 to vector<16x16xf32>
    %55 = arith.mulf %54, %53 : vector<16x16xf32>
    %56 = arith.addf %52, %55 : vector<16x16xf32>
    %c0_16 = arith.constant 0 : index
    %c3 = arith.constant 3 : index
    %57 = memref.load %arg2[%c0_16, %c3] : memref<2x9xf32, #tpu.memory_space<smem>>
    %c1_17 = arith.constant 1 : index
    %c3_18 = arith.constant 3 : index
    %58 = memref.load %arg2[%c1_17, %c3_18] : memref<2x9xf32, #tpu.memory_space<smem>>
    %59 = vector.extract_strided_slice %23 {offsets = [1, 0], sizes = [16, 16], strides = [1, 1]} : vector<18x18xf32> to vector<16x16xf32>
    %60 = vector.broadcast %57 : f32 to vector<16x16xf32>
    %61 = arith.mulf %60, %59 : vector<16x16xf32>
    %62 = arith.addf %56, %61 : vector<16x16xf32>
    %63 = vector.extract_strided_slice %25 {offsets = [1, 0], sizes = [16, 16], strides = [1, 1]} : vector<18x18xf32> to vector<16x16xf32>
    %64 = vector.broadcast %58 : f32 to vector<16x16xf32>
    %65 = arith.mulf %64, %63 : vector<16x16xf32>
    %66 = arith.addf %62, %65 : vector<16x16xf32>
    %c0_19 = arith.constant 0 : index
    %c4 = arith.constant 4 : index
    %67 = memref.load %arg2[%c0_19, %c4] : memref<2x9xf32, #tpu.memory_space<smem>>
    %c1_20 = arith.constant 1 : index
    %c4_21 = arith.constant 4 : index
    %68 = memref.load %arg2[%c1_20, %c4_21] : memref<2x9xf32, #tpu.memory_space<smem>>
    %69 = vector.extract_strided_slice %23 {offsets = [1, 1], sizes = [16, 16], strides = [1, 1]} : vector<18x18xf32> to vector<16x16xf32>
    %70 = vector.broadcast %67 : f32 to vector<16x16xf32>
    %71 = arith.mulf %70, %69 : vector<16x16xf32>
    %72 = arith.addf %66, %71 : vector<16x16xf32>
    %73 = vector.extract_strided_slice %25 {offsets = [1, 1], sizes = [16, 16], strides = [1, 1]} : vector<18x18xf32> to vector<16x16xf32>
    %74 = vector.broadcast %68 : f32 to vector<16x16xf32>
    %75 = arith.mulf %74, %73 : vector<16x16xf32>
    %76 = arith.addf %72, %75 : vector<16x16xf32>
    %c0_22 = arith.constant 0 : index
    %c5 = arith.constant 5 : index
    %77 = memref.load %arg2[%c0_22, %c5] : memref<2x9xf32, #tpu.memory_space<smem>>
    %c1_23 = arith.constant 1 : index
    %c5_24 = arith.constant 5 : index
    %78 = memref.load %arg2[%c1_23, %c5_24] : memref<2x9xf32, #tpu.memory_space<smem>>
    %79 = vector.extract_strided_slice %23 {offsets = [1, 2], sizes = [16, 16], strides = [1, 1]} : vector<18x18xf32> to vector<16x16xf32>
    %80 = vector.broadcast %77 : f32 to vector<16x16xf32>
    %81 = arith.mulf %80, %79 : vector<16x16xf32>
    %82 = arith.addf %76, %81 : vector<16x16xf32>
    %83 = vector.extract_strided_slice %25 {offsets = [1, 2], sizes = [16, 16], strides = [1, 1]} : vector<18x18xf32> to vector<16x16xf32>
    %84 = vector.broadcast %78 : f32 to vector<16x16xf32>
    %85 = arith.mulf %84, %83 : vector<16x16xf32>
    %86 = arith.addf %82, %85 : vector<16x16xf32>
    %c0_25 = arith.constant 0 : index
    %c6 = arith.constant 6 : index
    %87 = memref.load %arg2[%c0_25, %c6] : memref<2x9xf32, #tpu.memory_space<smem>>
    %c1_26 = arith.constant 1 : index
    %c6_27 = arith.constant 6 : index
    %88 = memref.load %arg2[%c1_26, %c6_27] : memref<2x9xf32, #tpu.memory_space<smem>>
    %89 = vector.extract_strided_slice %23 {offsets = [2, 0], sizes = [16, 16], strides = [1, 1]} : vector<18x18xf32> to vector<16x16xf32>
    %90 = vector.broadcast %87 : f32 to vector<16x16xf32>
    %91 = arith.mulf %90, %89 : vector<16x16xf32>
    %92 = arith.addf %86, %91 : vector<16x16xf32>
    %93 = vector.extract_strided_slice %25 {offsets = [2, 0], sizes = [16, 16], strides = [1, 1]} : vector<18x18xf32> to vector<16x16xf32>
    %94 = vector.broadcast %88 : f32 to vector<16x16xf32>
    %95 = arith.mulf %94, %93 : vector<16x16xf32>
    %96 = arith.addf %92, %95 : vector<16x16xf32>
    %c0_28 = arith.constant 0 : index
    %c7 = arith.constant 7 : index
    %97 = memref.load %arg2[%c0_28, %c7] : memref<2x9xf32, #tpu.memory_space<smem>>
    %c1_29 = arith.constant 1 : index
    %c7_30 = arith.constant 7 : index
    %98 = memref.load %arg2[%c1_29, %c7_30] : memref<2x9xf32, #tpu.memory_space<smem>>
    %99 = vector.extract_strided_slice %23 {offsets = [2, 1], sizes = [16, 16], strides = [1, 1]} : vector<18x18xf32> to vector<16x16xf32>
    %100 = vector.broadcast %97 : f32 to vector<16x16xf32>
    %101 = arith.mulf %100, %99 : vector<16x16xf32>
    %102 = arith.addf %96, %101 : vector<16x16xf32>
    %103 = vector.extract_strided_slice %25 {offsets = [2, 1], sizes = [16, 16], strides = [1, 1]} : vector<18x18xf32> to vector<16x16xf32>
    %104 = vector.broadcast %98 : f32 to vector<16x16xf32>
    %105 = arith.mulf %104, %103 : vector<16x16xf32>
    %106 = arith.addf %102, %105 : vector<16x16xf32>
    %c0_31 = arith.constant 0 : index
    %c8 = arith.constant 8 : index
    %107 = memref.load %arg2[%c0_31, %c8] : memref<2x9xf32, #tpu.memory_space<smem>>
    %c1_32 = arith.constant 1 : index
    %c8_33 = arith.constant 8 : index
    %108 = memref.load %arg2[%c1_32, %c8_33] : memref<2x9xf32, #tpu.memory_space<smem>>
    %109 = vector.extract_strided_slice %23 {offsets = [2, 2], sizes = [16, 16], strides = [1, 1]} : vector<18x18xf32> to vector<16x16xf32>
    %110 = vector.broadcast %107 : f32 to vector<16x16xf32>
    %111 = arith.mulf %110, %109 : vector<16x16xf32>
    %112 = arith.addf %106, %111 : vector<16x16xf32>
    %113 = vector.extract_strided_slice %25 {offsets = [2, 2], sizes = [16, 16], strides = [1, 1]} : vector<18x18xf32> to vector<16x16xf32>
    %114 = vector.broadcast %108 : f32 to vector<16x16xf32>
    %115 = arith.mulf %114, %113 : vector<16x16xf32>
    %116 = arith.addf %112, %115 : vector<16x16xf32>
    %c0_34 = arith.constant 0 : index
    %c0_35 = arith.constant 0 : index
    %c0_36 = arith.constant 0 : index
    %c0_37 = arith.constant 0 : index
    %117 = vector.load %arg4[%c0_34, %c0_35, %c0_36, %c0_37] : memref<1x1x16x16xf32, #tpu.memory_space<vmem>>, vector<1x1x16x16xf32>
    %118 = vector.shape_cast %117 : vector<1x1x16x16xf32> to vector<16x16xf32>
    %119 = vector.shape_cast %116 : vector<16x16xf32> to vector<1x1x16x16xf32>
    tpu.vector_store %arg4[%c0_34, %c0_35, %c0_36, %c0_37], %119 {strides = array<i32>} : memref<1x1x16x16xf32, #tpu.memory_space<vmem>>, vector<1x1x16x16xf32>,
    %120 = arith.subf %116, %116 : vector<16x16xf32>
    %121 = math.exp %120 : vector<16x16xf32>
    %122 = arith.divf %121, %121 : vector<16x16xf32>
    %c0_38 = arith.constant 0 : index
    %c0_39 = arith.constant 0 : index
    %c0_40 = arith.constant 0 : index
    %c0_41 = arith.constant 0 : index
    %123 = vector.load %arg3[%c0_38, %c0_39, %c0_40, %c0_41] : memref<1x1x16x16xf32, #tpu.memory_space<vmem>>, vector<1x1x16x16xf32>
    %124 = vector.shape_cast %123 : vector<1x1x16x16xf32> to vector<16x16xf32>
    %125 = vector.shape_cast %122 : vector<16x16xf32> to vector<1x1x16x16xf32>
    tpu.vector_store %arg3[%c0_38, %c0_39, %c0_40, %c0_41], %125 {strides = array<i32>} : memref<1x1x16x16xf32, #tpu.memory_space<vmem>>, vector<1x1x16x16xf32>,
    return
  }
  func.func @transform_0(%arg0: i32) -> (i32, i32, i32, i32) {
    %c0_i32 = arith.constant 0 : i32
    %c0_i32_0 = arith.constant 0 : i32
    %c0_i32_1 = arith.constant 0 : i32
    %c0_i32_2 = arith.constant 0 : i32
    return %arg0, %c0_i32, %c0_i32_0, %c0_i32_1 : i32, i32, i32, i32
  }
  func.func @transform_1(%arg0: i32) -> (i32, i32) {
    %c0_i32 = arith.constant 0 : i32
    %c0_i32_0 = arith.constant 0 : i32
    %c0_i32_1 = arith.constant 0 : i32
    return %c0_i32, %c0_i32_0 : i32, i32
  }
  func.func @transform_2(%arg0: i32) -> (i32, i32, i32, i32) {
    %c0_i32 = arith.constant 0 : i32
    %c0_i32_0 = arith.constant 0 : i32
    %c0_i32_1 = arith.constant 0 : i32
    %c0_i32_2 = arith.constant 0 : i32
    return %arg0, %c0_i32, %c0_i32_0, %c0_i32_1 : i32, i32, i32, i32
  }
  func.func @transform_3(%arg0: i32) -> (i32, i32, i32, i32) {
    %c0_i32 = arith.constant 0 : i32
    %c0_i32_0 = arith.constant 0 : i32
    %c0_i32_1 = arith.constant 0 : i32
    %c0_i32_2 = arith.constant 0 : i32
    return %arg0, %c0_i32, %c0_i32_0, %c0_i32_1 : i32, i32, i32, i32
  }
}

</mosaic_0001>

<llo_original>
// kernel: tpu_custom_call.1
$region0: #{tpu_custom_call.1}
  #allocation0 [shape = 'u32[]', space=smem, size = 0x4, offset = 0x4, fixed_abs, tag = 'smem constant byte address 0x4 - core index']
  #allocation1 [shape = 'u32[144,128]{1,0:T(1,128)}', space=vmem, size = 0x12000, scoped, tag = 'internal scratch']
  %s0 = inlined_call_operand.hbm [shape: f32[2,4,16,16], index: 0, kind: input, shape index: {}]
  %s1 = inlined_call_operand.hbm [shape: f32[2,9], index: 1, kind: input, shape index: {}]
  %s2 = inlined_call_operand.hbm [shape: f32[2,1,16,16], index: 2, kind: output, shape index: {0}]
  %s3 = inlined_call_operand.hbm [shape: f32[2,1,16,16], index: 3, kind: output, shape index: {1}]
  %4 = xla_tuple %s2, %s3
  %s5 = sld [smem:[#allocation0]]
  $region57: #{tpu_custom_call.1} parent=0
    _
  %s7 = ssub.s32 1, %s5
  %s8 = scalar_select 0, %s7, %s5
  $region1: #{tpu_custom_call.1} parent=0
    #allocation2 [shape = 'u8[65536]{0}', space=vmem, size = 0x10000, scoped, tag = 'input window, operand 0']
    #allocation3 [shape = 's32[2]{0}', space=sflag, size = 0x8, scoped, tag = 'scoped memory for tpu_custom_call.1']
    #allocation4 [shape = 's32[2]{0}', space=sflag, size = 0x8, scoped, tag = 'scoped memory for tpu_custom_call.1']
    #allocation5 [shape = 's32[2]{0}', space=sflag, size = 0x8, scoped, tag = 'scoped memory for tpu_custom_call.1']
    #allocation6 [shape = 'u8[1024]{0}', space=smem, size = 0x400, scoped, tag = 'input window, operand 1, single buffered']
    #allocation7 [shape = 'u8[16384]{0}', space=vmem, size = 0x4000, scoped, tag = 'output window, operand 0']
    #allocation8 [shape = 'u8[16384]{0}', space=vmem, size = 0x4000, scoped, tag = 'output window, operand 1']
    #allocation9 [shape = 's32[2]{0}', space=sflag, size = 0x8, scoped, tag = 'scoped memory for tpu_custom_call.1']
    %9 = vsyncpa [#allocation3], 0
    %s10 = scalar_lea.sflag [#allocation3], 1
    %11 = vsyncpa %s10, 0
    %12 = vsyncpa [#allocation5], 0
    %13 = vsyncpa [#allocation4], 0
    %s14 = scalar_lea.sflag [#allocation4], 1
    %15 = vsyncpa %s14, 0
    %16 = vsyncpa [#allocation9], 0
    %s17 = scalar_lea.sflag [#allocation9], 1
    %18 = vsyncpa %s17, 0
    loop: start=0, step=1, limit=4
    $region2: #{tpu_custom_call.1} parent=1 // loop_pre_header
      _
    $region3: #{tpu_custom_call.1} parent=1 // loop_header
      %s20 = sphi 0, %s24
      %p21 = scmp.ge.s32.totalorder %s20, 4
      %s30 = sphi 0, %s32
      %s33 = sphi 0, %s30
      %s34 = sphi 0, %s33
      %s50 = sphi 0, %s34
      %s54 = sphi 0, %s54
      %s56 = sphi 0, %s54
      %s57 = sphi 0, %s56
      %s71 = sphi 0, %s57
      %s77 = sphi 0, %s79
      %s80 = sphi 0, %s77
      %s81 = sphi 0, %s80
      %s97 = sphi 0, %s81
      %s103 = sphi 0, %s105
      %s106 = sphi 0, %s103
      %s107 = sphi 0, %s106
      %s123 = sphi 0, %s107
    $region4: #{tpu_custom_call.1} parent=1 // loop_header_branch
      %23 = sbr.rel (%p21) target = $region8
    $region5: #{tpu_custom_call.1} parent=1 // loop_body
      %s25 = ssub.s32 %s20, 1
      %s26 = ssub.s32 %s20, 2
      %s27 = sadd.s32 %s20, 1
      %s28 = ssub.s32 %s20, %s27
      %p29 = scmp.eq.s32.totalorder %s28, 0
      %s31 = sadd.s32 %s30, 1
      %s32 = scalar_select %p29, %s30, %s31
      %p35 = pneg %p29
      %p36 = scmp.eq.s32.totalorder %s20, 1
      %p37 = por %p35, %p36
      %p38 = scmp.ne.s32.totalorder %s30, %s33
      %p39 = scmp.eq.s32.totalorder %s20, 0
      %p40 = por %p38, %p39
      %p41 = scmp.ne.s32.totalorder %s30, %s33
      %p42 = scmp.eq.s32.totalorder %s25, 1
      %p43 = por %p41, %p42
      %p44 = scmp.ne.s32.totalorder %s33, %s34
      %p45 = scmp.eq.s32.totalorder %s25, 0
      %p46 = por %p44, %p45
      %p47 = scmp.ne.s32.totalorder %s33, %s34
      %p48 = scmp.eq.s32.totalorder %s26, 1
      %p49 = por %p47, %p48
      %p51 = scmp.ne.s32.totalorder %s34, %s50
      %p52 = scmp.eq.s32.totalorder %s26, 0
      %p53 = por %p51, %p52
      %s55 = sadd.s32 %s54, 1
      %p58 = scmp.eq.s32.totalorder %s20, 1
      %p59 = scmp.ne.s32.totalorder %s54, %s56
      %p60 = scmp.eq.s32.totalorder %s20, 0
      %p61 = por %p59, %p60
      %p62 = scmp.ne.s32.totalorder %s54, %s56
      %p63 = scmp.eq.s32.totalorder %s25, 1
      %p64 = por %p62, %p63
      %p65 = scmp.ne.s32.totalorder %s56, %s57
      %p66 = scmp.eq.s32.totalorder %s25, 0
      %p67 = por %p65, %p66
      %p68 = scmp.ne.s32.totalorder %s56, %s57
      %p69 = scmp.eq.s32.totalorder %s26, 1
      %p70 = por %p68, %p69
      %p72 = scmp.ne.s32.totalorder %s57, %s71
      %p73 = scmp.eq.s32.totalorder %s26, 0
      %p74 = por %p72, %p73
      %s75 = ssub.s32 %s20, %s27
      %p76 = scmp.eq.s32.totalorder %s75, 0
      %s78 = sadd.s32 %s77, 1
      %s79 = scalar_select %p76, %s77, %s78
      %p82 = pneg %p76
      %p83 = scmp.eq.s32.totalorder %s20, 1
      %p84 = por %p82, %p83
      %p85 = scmp.ne.s32.totalorder %s77, %s80
      %p86 = scmp.eq.s32.totalorder %s20, 0
      %p87 = por %p85, %p86
      %p88 = scmp.ne.s32.totalorder %s77, %s80
      %p89 = scmp.eq.s32.totalorder %s25, 1
      %p90 = por %p88, %p89
      %p91 = scmp.ne.s32.totalorder %s80, %s81
      %p92 = scmp.eq.s32.totalorder %s25, 0
      %p93 = por %p91, %p92
      %p94 = scmp.ne.s32.totalorder %s80, %s81
      %p95 = scmp.eq.s32.totalorder %s26, 1
      %p96 = por %p94, %p95
      %p98 = scmp.ne.s32.totalorder %s81, %s97
      %p99 = scmp.eq.s32.totalorder %s26, 0
      %p100 = por %p98, %p99
      %s101 = ssub.s32 %s20, %s27
      %p102 = scmp.eq.s32.totalorder %s101, 0
      %s104 = sadd.s32 %s103, 1
      %s105 = scalar_select %p102, %s103, %s104
      %p108 = pneg %p102
      %p109 = scmp.eq.s32.totalorder %s20, 1
      %p110 = por %p108, %p109
      %p111 = scmp.ne.s32.totalorder %s103, %s106
      %p112 = scmp.eq.s32.totalorder %s20, 0
      %p113 = por %p111, %p112
      %p114 = scmp.ne.s32.totalorder %s103, %s106
      %p115 = scmp.eq.s32.totalorder %s25, 1
      %p116 = por %p114, %p115
      %p117 = scmp.ne.s32.totalorder %s106, %s107
      %p118 = scmp.eq.s32.totalorder %s25, 0
      %p119 = por %p117, %p118
      %p120 = scmp.ne.s32.totalorder %s106, %s107
      %p121 = scmp.eq.s32.totalorder %s26, 1
      %p122 = por %p120, %p121
      %p124 = scmp.ne.s32.totalorder %s107, %s123
      %p125 = scmp.eq.s32.totalorder %s26, 0
      %p126 = por %p124, %p125
      %p127 = scmp.le.s32.totalorder 1, %s20
      %p128 = scmp.lt.s32.totalorder %s20, 3
      %p129 = pnand %p127, %p128
      %p130 = pneg %p129
      // Predicated region
      $region9: #{tpu_custom_call.1} parent=5 // pred_check
        _
      $region10: #{tpu_custom_call.1} parent=5 // pred_check_branch
        %132 = sbr.rel (%p129) target = $region12
      $region11: #{tpu_custom_call.1} parent=5 // pred_region
        %s133 = ssub.s32 %s20, 1
        // Predicated region
        $region13: #{tpu_custom_call.1} parent=11 // pred_check
          %p134 = pneg %p67
        $region14: #{tpu_custom_call.1} parent=11 // pred_check_branch
          %136 = sbr.rel (%p134) target = $region16
        $region15: #{tpu_custom_call.1} parent=11 // pred_region
          %s138 = ssub.s32 32, 32
          %139 = vsyncadd [#allocation5], %s138
          %142 = dma.hbm_to_smem %s1, 32, [#allocation6], [#allocation5]
        $region16: #{tpu_custom_call.1} parent=11 // pred_fallthru
          _
      $region12: #{tpu_custom_call.1} parent=5 // pred_fallthru
        _
      %p143 = scmp.lt.s32.totalorder %s20, 2
      // Predicated region
      $region17: #{tpu_custom_call.1} parent=5 // pred_check
        %p144 = pneg %p143
      $region18: #{tpu_custom_call.1} parent=5 // pred_check_branch
        %146 = sbr.rel (%p144) target = $region20
      $region19: #{tpu_custom_call.1} parent=5 // pred_region
        // Predicated region
        $region21: #{tpu_custom_call.1} parent=19 // pred_check
          %p147 = pneg %p40
        $region22: #{tpu_custom_call.1} parent=19 // pred_check_branch
          %149 = sbr.rel (%p147) target = $region24
        $region23: #{tpu_custom_call.1} parent=19 // pred_region
          %s150 = sand.u32 %s30, 1
          %s151 = scalar_lea.sflag [#allocation3], %s150
          %s152 = sand.u32 %s30, 1
          %s153 = smul.addr %s152, 64
          %s154 = scalar_lea.vmem [#allocation2], %s153
          %s156 = ssub.s32 1024, 1024
          %157 = vsyncadd %s151, %s156
          %s158 = smul.addr %s20, 8
          %s159 = smul.addr %s158, 128
          %s160 = scalar_lea.hbm %s0, %s159
          %s161 = sshll.u32 %s154, 4
          %s162 = int_to_ptr.vmem [resolvable:$true] %s161
          %167 = dma.hbm_to_vmem [thread:$0]  %s160, 1024, %s162, %s151, 128, 128, 8
        $region24: #{tpu_custom_call.1} parent=19 // pred_fallthru
          _
      $region20: #{tpu_custom_call.1} parent=5 // pred_fallthru
        _
      %p168 = scmp.le.s32.totalorder 1, %s20
      %p169 = scmp.lt.s32.totalorder %s20, 3
      %p170 = pnand %p168, %p169
      %p171 = pneg %p170
      // Predicated region
      $region25: #{tpu_custom_call.1} parent=5 // pred_check
        _
      $region26: #{tpu_custom_call.1} parent=5 // pred_check_branch
        %173 = sbr.rel (%p170) target = $region28
      $region27: #{tpu_custom_call.1} parent=5 // pred_region
        %s174 = ssub.s32 %s20, 1
        %s175 = sand.u32 %s33, 1
        %s176 = scalar_lea.sflag [#allocation3], %s175
        %s177 = sand.u32 %s33, 1
        %s178 = smul.addr %s177, 64
        %s179 = scalar_lea.vmem [#allocation2], %s178
        // Predicated region
        $region29: #{tpu_custom_call.1} parent=27 // pred_check
          %p180 = pneg %p46
        $region30: #{tpu_custom_call.1} parent=27 // pred_check_branch
          %182 = sbr.rel (%p180) target = $region32
        $region31: #{tpu_custom_call.1} parent=27 // pred_region
          %183 = dma.done %s176, 1024
        $region32: #{tpu_custom_call.1} parent=27 // pred_fallthru
          _
        // Predicated region
        $region33: #{tpu_custom_call.1} parent=27 // pred_check
          %p184 = pneg %p67
        $region34: #{tpu_custom_call.1} parent=27 // pred_check_branch
          %186 = sbr.rel (%p184) target = $region36
        $region35: #{tpu_custom_call.1} parent=27 // pred_region
          %187 = dma.done [#allocation5], 32
        $region36: #{tpu_custom_call.1} parent=27 // pred_fallthru
          _
        %188 = sfence
        %s189 = sand.u32 %s33, 1
        %s190 = scalar_lea.sflag [#allocation3], %s189
        %s191 = sand.u32 %s33, 1
        %s192 = smul.addr %s191, 64
        %s193 = scalar_lea.vmem [#allocation2], %s192
        %p194 = pneg %p46
        %p195 = pneg %p43
        %p196 = pneg %p67
        %p197 = pneg %p64
        %p198 = pneg %p93
        %p199 = pneg %p90
        %s200 = sand.u32 %s80, 1
        %s201 = scalar_lea.sflag [#allocation4], %s200
        %s202 = sand.u32 %s80, 1
        %s203 = smul.addr %s202, 16
        %s204 = scalar_lea.vmem [#allocation7], %s203
        %p205 = pneg %p119
        %p206 = pneg %p116
        %s207 = sand.u32 %s106, 1
        %s208 = scalar_lea.sflag [#allocation9], %s207
        %s209 = sand.u32 %s106, 1
        %s210 = smul.addr %s209, 16
        %s211 = scalar_lea.vmem [#allocation8], %s210
        %v212 = vld [vmem:[%s179] sm:$0xff]
        %v213 = vld [vmem:[%s179 + $0x8] sm:$0xff]
        %v214 = vld [vmem:[%s179 + $0x10] sm:$0xff]
        %v215 = vld [vmem:[%s179 + $0x18] sm:$0xff]
        %v216 = vld [vmem:[%s179 + $0x20] sm:$0xff]
        %v217 = vld [vmem:[%s179 + $0x28] sm:$0xff]
        %v218 = vld [vmem:[%s179 + $0x30] sm:$0xff]
        %v219 = vld [vmem:[%s179 + $0x38] sm:$0xff]
        %v220 = vadd.f32 %v212, %v214
        %v221 = vadd.f32 %v213, %v215
        %v222 = vmax.f32 %v212, %v214
        %v223 = vmax.f32 %v213, %v215
        %v224 = vadd.f32 %v220, %v216
        %v225 = vadd.f32 %v221, %v217
        %v226 = vmax.f32 %v222, %v216
        %v227 = vmax.f32 %v223, %v217
        %v228 = vadd.f32 %v224, %v218
        %v229 = vadd.f32 %v225, %v219
        %v230 = vmax.f32 %v226, %v218
        %v231 = vmax.f32 %v227, %v219
        %v232 = vmul.f32 %v228, 0.25
        %v233 = vmul.f32 %v229, 0.25
        %vm236 = vcmask 1040384
        %v237 = vrot.slane %v232, 7
        %v238 = vrot.slane %v233, 7
        %v239 = vsel %vm236, %v237, %v238
        %v242 = vsel %vm236, 0.0, %v237
        %v243 = vsel %vm236, %v238, 0.0
        %246 = vrot.lane.b32.xlu0 %v242, 1
        %v247 = vpop.permute.xlu0 %246
        %248 = vrot.lane.b32.xlu0 %v239, 1
        %v249 = vpop.permute.xlu0 %248
        %250 = vrot.lane.b32.xlu0 %v243, 1
        %v251 = vpop.permute.xlu0 %250
        %vm255 = vcmask 7168
        %v256 = vsel %vm255, 0.0, %v247
        %v257 = vsel %vm255, 0.0, %v249
        %v258 = vsel %vm255, 0.0, %v251
        %vm259 = vcmask 138240
        %v260 = vsel %vm259, %v256, 0.0
        %v261 = vsel %vm259, %v257, 0.0
        %v262 = vsel %vm259, %v258, 0.0
        %v265 = vrot.slane %v230, 7
        %v266 = vrot.slane %v231, 7
        %v267 = vsel %vm236, %v265, %v266
        %v270 = vsel %vm236, 0.0, %v265
        %v271 = vsel %vm236, %v266, 0.0
        %274 = vrot.lane.b32.xlu0 %v270, 1
        %v275 = vpop.permute.xlu0 %274
        %276 = vrot.lane.b32.xlu0 %v267, 1
        %v277 = vpop.permute.xlu0 %276
        %278 = vrot.lane.b32.xlu0 %v271, 1
        %v279 = vpop.permute.xlu0 %278
        %v283 = vsel %vm255, 0.0, %v275
        %v284 = vsel %vm255, 0.0, %v277
        %v285 = vsel %vm255, 0.0, %v279
        %v286 = vsel %vm259, %v283, 0.0
        %v287 = vsel %vm259, %v284, 0.0
        %v288 = vsel %vm259, %v285, 0.0
        %s289 = sld [smem:[#allocation6]]
        %s290 = sld [smem:[#allocation6 + $0x80]]
        %v291 = vstv %s289
        %v292 = vmul.f32 %v291, %v260
        %v293 = vmul.f32 %v291, %v261
        %v294 = vadd.f32 %v292, 0.0
        %v295 = vadd.f32 %v293, 0.0
        %v296 = vstv %s290
        %v297 = vmul.f32 %v296, %v286
        %v298 = vmul.f32 %v296, %v287
        %v299 = vadd.f32 %v294, %v297
        %v300 = vadd.f32 %v295, %v298
        %s301 = sld [smem:[#allocation6 + $0x1]]
        %s302 = sld [smem:[#allocation6 + $0x81]]
        %v303 = vstv %s301
        %v304 = vmul.f32 %v303, %v260
        %v305 = vmul.f32 %v303, %v261
        %308 = vrot.lane.b32.xlu0 %v304, 127
        %v309 = vpop.permute.xlu0 %308
        %310 = vrot.lane.b32.xlu0 %v305, 127
        %v311 = vpop.permute.xlu0 %310
        %v314 = vadd.f32 %v299, %v309
        %v315 = vadd.f32 %v300, %v311
        %v316 = vstv %s302
        %v317 = vmul.f32 %v316, %v286
        %v318 = vmul.f32 %v316, %v287
        %321 = vrot.lane.b32.xlu0 %v317, 127
        %v322 = vpop.permute.xlu0 %321
        %323 = vrot.lane.b32.xlu0 %v318, 127
        %v324 = vpop.permute.xlu0 %323
        %v327 = vadd.f32 %v314, %v322
        %v328 = vadd.f32 %v315, %v324
        %s329 = sld [smem:[#allocation6 + $0x2]]
        %s330 = sld [smem:[#allocation6 + $0x82]]
        %v331 = vstv %s329
        %v332 = vmul.f32 %v331, %v260
        %v333 = vmul.f32 %v331, %v261
        %336 = vrot.lane.b32.xlu0 %v332, 126
        %v337 = vpop.permute.xlu0 %336
        %338 = vrot.lane.b32.xlu0 %v333, 126
        %v339 = vpop.permute.xlu0 %338
        %v342 = vadd.f32 %v327, %v337
        %v343 = vadd.f32 %v328, %v339
        %v344 = vstv %s330
        %v345 = vmul.f32 %v344, %v286
        %v346 = vmul.f32 %v344, %v287
        %349 = vrot.lane.b32.xlu0 %v345, 126
        %v350 = vpop.permute.xlu0 %349
        %351 = vrot.lane.b32.xlu0 %v346, 126
        %v352 = vpop.permute.xlu0 %351
        %v355 = vadd.f32 %v342, %v350
        %v356 = vadd.f32 %v343, %v352
        %s357 = sld [smem:[#allocation6 + $0x3]]
        %s358 = sld [smem:[#allocation6 + $0x83]]
        %v359 = vstv %s357
        %v360 = vmul.f32 %v359, %v260
        %v361 = vmul.f32 %v359, %v261
        %v362 = vmul.f32 %v359, %v262
        %vm366 = vcmask 1046528
        %v367 = vrot.slane %v360, 1
        %v368 = vrot.slane %v361, 1
        %v369 = vsel %vm366, %v367, %v368
        %v370 = vrot.slane %v362, 1
        %v371 = vsel %vm366, %v368, %v370
        %v374 = vadd.f32 %v355, %v369
        %v375 = vadd.f32 %v356, %v371
        %v376 = vstv %s358
        %v377 = vmul.f32 %v376, %v286
        %v378 = vmul.f32 %v376, %v287
        %v379 = vmul.f32 %v376, %v288
        %v383 = vrot.slane %v377, 1
        %v384 = vrot.slane %v378, 1
        %v385 = vsel %vm366, %v383, %v384
        %v386 = vrot.slane %v379, 1
        %v387 = vsel %vm366, %v384, %v386
        %v390 = vadd.f32 %v374, %v385
        %v391 = vadd.f32 %v375, %v387
        %s392 = sld [smem:[#allocation6 + $0x4]]
        %s393 = sld [smem:[#allocation6 + $0x84]]
        %v394 = vstv %s392
        %v395 = vmul.f32 %v394, %v260
        %v396 = vmul.f32 %v394, %v261
        %v397 = vmul.f32 %v394, %v262
        %v401 = vrot.slane %v395, 1
        %v402 = vrot.slane %v396, 1
        %v403 = vsel %vm366, %v401, %v402
        %v404 = vrot.slane %v397, 1
        %v405 = vsel %vm366, %v402, %v404
        %406 = vrot.lane.b32.xlu0 %v403, 127
        %v407 = vpop.permute.xlu0 %406
        %408 = vrot.lane.b32.xlu0 %v405, 127
        %v409 = vpop.permute.xlu0 %408
        %v412 = vadd.f32 %v390, %v407
        %v413 = vadd.f32 %v391, %v409
        %v414 = vstv %s393
        %v415 = vmul.f32 %v414, %v286
        %v416 = vmul.f32 %v414, %v287
        %v417 = vmul.f32 %v414, %v288
        %v421 = vrot.slane %v415, 1
        %v422 = vrot.slane %v416, 1
        %v423 = vsel %vm366, %v421, %v422
        %v424 = vrot.slane %v417, 1
        %v425 = vsel %vm366, %v422, %v424
        %426 = vrot.lane.b32.xlu0 %v423, 127
        %v427 = vpop.permute.xlu0 %426
        %428 = vrot.lane.b32.xlu0 %v425, 127
        %v429 = vpop.permute.xlu0 %428
        %v432 = vadd.f32 %v412, %v427
        %v433 = vadd.f32 %v413, %v429
        %s434 = sld [smem:[#allocation6 + $0x5]]
        %s435 = sld [smem:[#allocation6 + $0x85]]
        %v436 = vstv %s434
        %v437 = vmul.f32 %v436, %v260
        %v438 = vmul.f32 %v436, %v261
        %v439 = vmul.f32 %v436, %v262
        %v443 = vrot.slane %v437, 1
        %v444 = vrot.slane %v438, 1
        %v445 = vsel %vm366, %v443, %v444
        %v446 = vrot.slane %v439, 1
        %v447 = vsel %vm366, %v444, %v446
        %448 = vrot.lane.b32.xlu0 %v445, 126
        %v449 = vpop.permute.xlu0 %448
        %450 = vrot.lane.b32.xlu0 %v447, 126
        %v451 = vpop.permute.xlu0 %450
        %v454 = vadd.f32 %v432, %v449
        %v455 = vadd.f32 %v433, %v451
        %v456 = vstv %s435
        %v457 = vmul.f32 %v456, %v286
        %v458 = vmul.f32 %v456, %v287
        %v459 = vmul.f32 %v456, %v288
        %v463 = vrot.slane %v457, 1
        %v464 = vrot.slane %v458, 1
        %v465 = vsel %vm366, %v463, %v464
        %v466 = vrot.slane %v459, 1
        %v467 = vsel %vm366, %v464, %v466
        %468 = vrot.lane.b32.xlu0 %v465, 126
        %v469 = vpop.permute.xlu0 %468
        %470 = vrot.lane.b32.xlu0 %v467, 126
        %v471 = vpop.permute.xlu0 %470
        %v474 = vadd.f32 %v454, %v469
        %v475 = vadd.f32 %v455, %v471
        %s476 = sld [smem:[#allocation6 + $0x6]]
        %s477 = sld [smem:[#allocation6 + $0x86]]
        %v478 = vstv %s476
        %v479 = vmul.f32 %v478, %v260
        %v480 = vmul.f32 %v478, %v261
        %v481 = vmul.f32 %v478, %v262
        %vm485 = vcmask 1045504
        %v486 = vrot.slane %v479, 2
        %v487 = vrot.slane %v480, 2
        %v488 = vsel %vm485, %v486, %v487
        %v489 = vrot.slane %v481, 2
        %v490 = vsel %vm485, %v487, %v489
        %v493 = vadd.f32 %v474, %v488
        %v494 = vadd.f32 %v475, %v490
        %v495 = vstv %s477
        %v496 = vmul.f32 %v495, %v286
        %v497 = vmul.f32 %v495, %v287
        %v498 = vmul.f32 %v495, %v288
        %v502 = vrot.slane %v496, 2
        %v503 = vrot.slane %v497, 2
        %v504 = vsel %vm485, %v502, %v503
        %v505 = vrot.slane %v498, 2
        %v506 = vsel %vm485, %v503, %v505
        %v509 = vadd.f32 %v493, %v504
        %v510 = vadd.f32 %v494, %v506
        %s511 = sld [smem:[#allocation6 + $0x7]]
        %s512 = sld [smem:[#allocation6 + $0x87]]
        %v513 = vstv %s511
        %v514 = vmul.f32 %v513, %v260
        %v515 = vmul.f32 %v513, %v261
        %v516 = vmul.f32 %v513, %v262
        %v520 = vrot.slane %v514, 2
        %v521 = vrot.slane %v515, 2
        %v522 = vsel %vm485, %v520, %v521
        %v523 = vrot.slane %v516, 2
        %v524 = vsel %vm485, %v521, %v523
        %525 = vrot.lane.b32.xlu0 %v522, 127
        %v526 = vpop.permute.xlu0 %525
        %527 = vrot.lane.b32.xlu0 %v524, 127
        %v528 = vpop.permute.xlu0 %527
        %v531 = vadd.f32 %v509, %v526
        %v532 = vadd.f32 %v510, %v528
        %v533 = vstv %s512
        %v534 = vmul.f32 %v533, %v286
        %v535 = vmul.f32 %v533, %v287
        %v536 = vmul.f32 %v533, %v288
        %v540 = vrot.slane %v534, 2
        %v541 = vrot.slane %v535, 2
        %v542 = vsel %vm485, %v540, %v541
        %v543 = vrot.slane %v536, 2
        %v544 = vsel %vm485, %v541, %v543
        %545 = vrot.lane.b32.xlu0 %v542, 127
        %v546 = vpop.permute.xlu0 %545
        %547 = vrot.lane.b32.xlu0 %v544, 127
        %v548 = vpop.permute.xlu0 %547
        %v551 = vadd.f32 %v531, %v546
        %v552 = vadd.f32 %v532, %v548
        %s553 = sld [smem:[#allocation6 + $0x8]]
        %s554 = sld [smem:[#allocation6 + $0x88]]
        %v555 = vstv %s553
        %v556 = vmul.f32 %v555, %v260
        %v557 = vmul.f32 %v555, %v261
        %v558 = vmul.f32 %v555, %v262
        %v562 = vrot.slane %v556, 2
        %v563 = vrot.slane %v557, 2
        %v564 = vsel %vm485, %v562, %v563
        %v565 = vrot.slane %v558, 2
        %v566 = vsel %vm485, %v563, %v565
        %567 = vrot.lane.b32.xlu0 %v564, 126
        %v568 = vpop.permute.xlu0 %567
        %569 = vrot.lane.b32.xlu0 %v566, 126
        %v570 = vpop.permute.xlu0 %569
        %v573 = vadd.f32 %v551, %v568
        %v574 = vadd.f32 %v552, %v570
        %v575 = vstv %s554
        %v576 = vmul.f32 %v575, %v286
        %v577 = vmul.f32 %v575, %v287
        %v578 = vmul.f32 %v575, %v288
        %v582 = vrot.slane %v576, 2
        %v583 = vrot.slane %v577, 2
        %v584 = vsel %vm485, %v582, %v583
        %v585 = vrot.slane %v578, 2
        %v586 = vsel %vm485, %v583, %v585
        %587 = vrot.lane.b32.xlu0 %v584, 126
        %v588 = vpop.permute.xlu0 %587
        %589 = vrot.lane.b32.xlu0 %v586, 126
        %v590 = vpop.permute.xlu0 %589
        %v593 = vadd.f32 %v573, %v588
        %v594 = vadd.f32 %v574, %v590
        %vm595 = vcmask 130048
        %596 = vst.msk [vmem:[%s211] sm:$0xff] %vm595, %v593
        %597 = vst.msk [vmem:[%s211 + $0x8] sm:$0xff] %vm595, %v594
        %v598 = vsub.f32 %v593, %v593
        %v599 = vsub.f32 %v594, %v594
        %v600 = vmul.f32 %v598, 1.442695
        %v601 = vpow.pop %v600
        %v602 = vmul.f32 %v599, 1.442695
        %v603 = vpow.pop %v602
        %v604 = vrcp.pop %v601
        %v605 = vmul.f32 %v601, %v604
        %v606 = vrcp.pop %v603
        %v607 = vmul.f32 %v603, %v606
        %608 = vst.msk [vmem:[%s204] sm:$0xff] %vm595, %v605
        %609 = vst.msk [vmem:[%s204 + $0x8] sm:$0xff] %vm595, %v607
        %s610 = sand.u32 %s80, 1
        %s611 = scalar_lea.sflag [#allocation4], %s610
        %s612 = sand.u32 %s80, 1
        %s613 = smul.addr %s612, 16
        %s614 = scalar_lea.vmem [#allocation7], %s613
        %s615 = sand.u32 %s106, 1
        %s616 = scalar_lea.sflag [#allocation9], %s615
        %s617 = sand.u32 %s106, 1
        %s618 = smul.addr %s617, 16
        %s619 = scalar_lea.vmem [#allocation8], %s618
        // Predicated region
        $region37: #{tpu_custom_call.1} parent=27 // pred_check
          %p620 = pneg %p90
        $region38: #{tpu_custom_call.1} parent=27 // pred_check_branch
          %622 = sbr.rel (%p620) target = $region40
        $region39: #{tpu_custom_call.1} parent=27 // pred_region
          %s624 = ssub.s32 256, 256
          %625 = vsyncadd %s611, %s624
          %s626 = smul.addr %s25, 2
          %s627 = smul.addr %s626, 128
          %s628 = scalar_lea.hbm %s2, %s627
          %s629 = sshll.u32 %s614, 4
          %s630 = int_to_ptr.vmem [resolvable:$true] %s629
          %635 = dma.vmem_to_hbm [thread:$0]  %s630, 256, %s628, %s611, 128, 128, 8
        $region40: #{tpu_custom_call.1} parent=27 // pred_fallthru
          _
        // Predicated region
        $region41: #{tpu_custom_call.1} parent=27 // pred_check
          %p636 = pneg %p116
        $region42: #{tpu_custom_call.1} parent=27 // pred_check_branch
          %638 = sbr.rel (%p636) target = $region44
        $region43: #{tpu_custom_call.1} parent=27 // pred_region
          %s640 = ssub.s32 256, 256
          %641 = vsyncadd %s616, %s640
          %s642 = smul.addr %s25, 2
          %s643 = smul.addr %s642, 128
          %s644 = scalar_lea.hbm %s3, %s643
          %s645 = sshll.u32 %s619, 4
          %s646 = int_to_ptr.vmem [resolvable:$true] %s645
          %651 = dma.vmem_to_hbm [thread:$0]  %s646, 256, %s644, %s616, 128, 128, 8
        $region44: #{tpu_custom_call.1} parent=27 // pred_fallthru
          _
      $region28: #{tpu_custom_call.1} parent=5 // pred_fallthru
        _
      %p652 = scmp.le.s32.totalorder 2, %s20
      // Predicated region
      $region45: #{tpu_custom_call.1} parent=5 // pred_check
        %p653 = pneg %p652
      $region46: #{tpu_custom_call.1} parent=5 // pred_check_branch
        %655 = sbr.rel (%p653) target = $region48
      $region47: #{tpu_custom_call.1} parent=5 // pred_region
        %s656 = ssub.s32 %s20, 2
        // Predicated region
        $region49: #{tpu_custom_call.1} parent=47 // pred_check
          %p657 = pneg %p96
        $region50: #{tpu_custom_call.1} parent=47 // pred_check_branch
          %659 = sbr.rel (%p657) target = $region52
        $region51: #{tpu_custom_call.1} parent=47 // pred_region
          %s660 = sand.u32 %s81, 1
          %s661 = scalar_lea.sflag [#allocation4], %s660
          %s662 = sand.u32 %s81, 1
          %s663 = smul.addr %s662, 16
          %s664 = scalar_lea.vmem [#allocation7], %s663
          %665 = dma.done %s661, 256
        $region52: #{tpu_custom_call.1} parent=47 // pred_fallthru
          _
        // Predicated region
        $region53: #{tpu_custom_call.1} parent=47 // pred_check
          %p666 = pneg %p122
        $region54: #{tpu_custom_call.1} parent=47 // pred_check_branch
          %668 = sbr.rel (%p666) target = $region56
        $region55: #{tpu_custom_call.1} parent=47 // pred_region
          %s669 = sand.u32 %s107, 1
          %s670 = scalar_lea.sflag [#allocation9], %s669
          %s671 = sand.u32 %s107, 1
          %s672 = smul.addr %s671, 16
          %s673 = scalar_lea.vmem [#allocation8], %s672
          %674 = dma.done %s670, 256
        $region56: #{tpu_custom_call.1} parent=47 // pred_fallthru
          _
      $region48: #{tpu_custom_call.1} parent=5 // pred_fallthru
        _
    $region6: #{tpu_custom_call.1} parent=1 // loop_footer
      %s24 = sadd.s32 1, %s20
    $region7: #{tpu_custom_call.1} parent=1 // loop_footer_branch
      %19 = sbr.rel target = $region3
    $region8: #{tpu_custom_call.1} parent=1 // loop_exit
      _
    %675 = vsyncpa [#allocation3], 1
    %s676 = scalar_lea.sflag [#allocation3], 1
    %677 = vsyncpa %s676, 1
    %678 = vsyncpa [#allocation4], 1
    %s679 = scalar_lea.sflag [#allocation4], 1
    %680 = vsyncpa %s679, 1
    %681 = vsyncpa [#allocation9], 1
    %s682 = scalar_lea.sflag [#allocation9], 1
    %683 = vsyncpa %s682, 1
    %684 = vsyncpa [#allocation5], 1
    %s685 = scalar_lea.sflag [#allocation5], 1
    %686 = vsyncpa %s685, 1

</llo_original>
